<compile_context>
chip_gen: v7x
topology: tpu7x:2x2x1
jax: 0.10.0
libtpu: 0.0.40
codegen_flags: <defaults>
</compile_context>

<pallas_src>
import functools

import jax
import jax.numpy as jnp
from jax.experimental import pallas as pl
from jax.experimental.pallas import tpu as pltpu

LANE = 128
SUBLANE = 8
MAX_BATCH_TILE = 1024


def _round_up(x: int, m: int) -> int:
    return ((x + m - 1) // m) * m


# --------------------------------------------------------------------------
# Kernel
# --------------------------------------------------------------------------
def _make_mlp_kernel(n_layers: int):
    """out = W_L · tanh(... tanh(x W_1 + b_1) ...) + b_L (lane-padded outputs).

    Precision is driven by the parameter dtypes: bf16 weights -> bf16 MXU
    operands (f32 accumulate); bf16 hidden biases -> bf16 epilogue.
    """

    def kernel(x_ref, *refs):
        out_ref = refs[-1]
        param_refs = refs[:-1]  # [w1, b1, w2, b2, ..., w_out, b_out]

        h = x_ref[...]  # (tb, d_in) activation tile, bf16 (or f32)
        for i in range(n_layers):
            w = param_refs[2 * i][...]       # resident weights
            b = param_refs[2 * i + 1][...]   # resident bias (1, 128k)
            acc = jnp.dot(h.astype(w.dtype), w,
                          preferred_element_type=jnp.float32)
            if i < n_layers - 1:
                # Epilogue in the bias dtype (bf16 on the fast path); tanh
                # output feeds the next matmul directly.
                h = jnp.tanh(acc.astype(b.dtype) + b)
            else:
                out_ref[...] = acc + b.astype(jnp.float32)

    return kernel


# --------------------------------------------------------------------------
# Parameters
# --------------------------------------------------------------------------
def init_estimator_params(key, action_num, state_dim, mlp_layers):
    """Deterministic init matching the PyTorch layer shapes.

    Linear(i -> o): weight stored as (i, o) so the kernel does x @ W + b,
    matching torch's x @ W^T with W of shape (o, i).
    """
    layer_dims = [state_dim] + list(mlp_layers) + [action_num]
    params = []
    for i in range(len(layer_dims) - 1):
        fan_in, fan_out = layer_dims[i], layer_dims[i + 1]
        key, kw, kb = jax.random.split(key, 3)
        bound = 1.0 / jnp.sqrt(jnp.float32(fan_in))
        w = jax.random.uniform(
            kw, (fan_in, fan_out), jnp.float32, minval=-bound, maxval=bound
        )
        b = jax.random.uniform(
            kb, (1, fan_out), jnp.float32, minval=-bound, maxval=bound
        )
        params.append((w, b))
    return params


def pad_params_for_kernel(params, use_bf16=True):
    """Pad lane (fan_out) dims to multiples of 128.

    The first layer's fan_in stays at the natural input width (no HBM pad on
    the activation stream); hidden fan_ins are padded to match the previous
    layer's padded fan_out.  Padded weight rows/cols and bias entries are
    exactly zero, so padded units stay inert (tanh(0)=0 feeding zero rows).
    Weights (and hidden biases, for the bf16 epilogue) are pre-cast to bf16;
    the final bias stays f32 for the f32 output.
    """
    n = len(params)
    padded = []
    for idx, (w, b) in enumerate(params):
        fi, fo = w.shape
        fi_p = fi if idx == 0 else _round_up(fi, LANE)
        fo_p = _round_up(fo, LANE)
        w_p = jnp.zeros((fi_p, fo_p), jnp.float32).at[:fi, :fo].set(w)
        b_p = jnp.zeros((1, fo_p), jnp.float32).at[:, :fo].set(b.reshape(1, fo))
        if use_bf16:
            w_p = w_p.astype(jnp.bfloat16)
            if idx < n - 1:
                b_p = b_p.astype(jnp.bfloat16)   # bf16 hidden epilogue
        padded.append((w_p, b_p))
    return padded


# --------------------------------------------------------------------------
# Forward pass
# --------------------------------------------------------------------------
def _choose_batch_tiling(b: int):
    """Balanced batch tiles; >=2 grid steps whenever the batch allows (v7x)."""
    b_min = _round_up(b, SUBLANE)
    num_tiles = pl.cdiv(b_min, MAX_BATCH_TILE)
    if num_tiles < 2 and b_min >= 2 * SUBLANE:
        num_tiles = 2            # let v7x shard the batch axis across 2 TCs
    tb = _round_up(pl.cdiv(b_min, num_tiles), SUBLANE)
    grid = pl.cdiv(b_min, tb)
    b_pad = grid * tb
    return tb, grid, b_pad


@functools.partial(jax.jit, static_argnames=("action_num", "use_bf16"))
def estimator_forward(states, padded_params, action_num, use_bf16=True):
    """Forward pass of EstimatorNetwork via a single batch-tiled Pallas call."""
    # nn.Flatten(): flatten everything after the batch dim.  Cast to the MXU
    # input dtype here so XLA fuses it with the reshape/pad (one HBM pass).
    b = states.shape[0]
    x = states.reshape(b, -1)
    in_dtype = jnp.bfloat16 if use_bf16 else jnp.float32
    if x.dtype != in_dtype:
        x = x.astype(in_dtype)

    d_in = x.shape[1]
    d_out_p = padded_params[-1][0].shape[1]   # padded action dim

    tb, grid, b_pad = _choose_batch_tiling(b)
    if b_pad != b:
        x = jnp.pad(x, ((0, b_pad - b), (0, 0)))   # batch rows only, no lane pad

    n_layers = len(padded_params)
    kernel = _make_mlp_kernel(n_layers)

    flat_params = []
    param_specs = []
    for w, bias in padded_params:
        flat_params.append(w)
        param_specs.append(pl.BlockSpec(w.shape, lambda i: (0, 0)))      # resident
        flat_params.append(bias)
        param_specs.append(pl.BlockSpec(bias.shape, lambda i: (0, 0)))   # resident

    # Advisory cost estimate (tiny latency-bound call at small batch).
    flops = 0
    transcendentals = 0
    for i, (w, _) in enumerate(padded_params):
        flops += 2 * b_pad * w.shape[0] * w.shape[1]
        if i < n_layers - 1:
            transcendentals += b_pad * w.shape[1]
    param_bytes = sum(int(w.size) * w.dtype.itemsize + int(bb.size) * bb.dtype.itemsize
                      for w, bb in padded_params)
    bytes_accessed = (b_pad * d_in * x.dtype.itemsize
                      + b_pad * d_out_p * 4
                      + param_bytes)

    out = pl.pallas_call(
        kernel,
        out_shape=jax.ShapeDtypeStruct((b_pad, d_out_p), jnp.float32),
        grid=(grid,),
        in_specs=[pl.BlockSpec((tb, d_in), lambda i: (i, 0))] + param_specs,
        out_specs=pl.BlockSpec((tb, d_out_p), lambda i: (i, 0)),
        compiler_params=pltpu.CompilerParams(
            dimension_semantics=("parallel",),
            vmem_limit_bytes=32 * 1024 * 1024,
        ),
        cost_estimate=pl.CostEstimate(
            flops=flops,
            transcendentals=transcendentals,
            bytes_accessed=bytes_accessed,
        ),
    )(x, *flat_params)

    # Drop batch padding and padded action columns (store inside is lane-dense).
    return out[:b, :action_num]


# --------------------------------------------------------------------------
# References
# --------------------------------------------------------------------------
def reference_forward(states, params):
    """Plain-JAX f32 reference matching the PyTorch module exactly."""
    b = states.shape[0]
    h = states.astype(jnp.float32).reshape(b, -1)
    for i, (w, bias) in enumerate(params):
        h = h @ w + bias
        if i < len(params) - 1:
            h = jnp.tanh(h)
    return h


def reference_forward_matched(states, padded_params, action_num, use_bf16=True):
    """Plain-JAX reference with identical padding / precision semantics."""
    b = states.shape[0]
    x = states.astype(jnp.float32).reshape(b, -1)
    in_dtype = jnp.bfloat16 if use_bf16 else jnp.float32
    h = x.astype(in_dtype)
    n = len(padded_params)
    out = None
    for i, (w, bias) in enumerate(padded_params):
        acc = jnp.dot(h.astype(w.dtype), w, preferred_element_type=jnp.float32)
        if i < n - 1:
            h = jnp.tanh(acc.astype(bias.dtype) + bias)
        else:
            out = acc + bias.astype(jnp.float32)
    return out[:, :action_num]


# --------------------------------------------------------------------------
if __name__ == "__main__":
    # Small shapes consistent with the module:
    #   state_shape = (32,), mlp_layers = [64, 32], action_num = 8
    action_num = 8
    state_dim = 32
    mlp_layers = [64, 32]
    use_bf16 = True

    key = jax.random.PRNGKey(0)
    key, k_params = jax.random.split(key)
    params = init_estimator_params(k_params, action_num, state_dim, mlp_layers)
    padded_params = pad_params_for_kernel(params, use_bf16=use_bf16)

    for batch in (8, 40):   # single-tile path and multi-tile (grid>=2) path
        key, k_states = jax.random.split(key)
        states = jax.random.normal(k_states, (batch, state_dim), jnp.float32)

        q_values = estimator_forward(states, padded_params, action_num, use_bf16)
        q_values = jax.block_until_ready(q_values)
        assert q_values.shape == (batch, action_num)

        # Tight check against the matched-precision (padded, bf16) reference.
        q_matched = reference_forward_matched(
            states, padded_params, action_num, use_bf16
        )
        assert jnp.allclose(q_values, q_matched, atol=5e-3, rtol=1e-3), (
            "Pallas output mismatch vs matched-precision reference"
        )

        # Loose check against the exact f32 PyTorch-equivalent reference
        # (difference is only bf16 operand/epilogue rounding).
        q_f32 = reference_forward(states, params)
        assert jnp.allclose(q_values, q_f32, atol=5e-2, rtol=0.0), (
            "Pallas output drifted too far from the f32 reference"
        )

    print("KERNEL_OK")
</pallas_src>

<mosaic_0001>
module attributes {stable_mosaic.version = 11 : i64} {
  func.func @kernel(%arg0: i32, %arg1: memref<8x32xbf16, #tpu.memory_space<vmem>>, %arg2: memref<32x128xbf16, #tpu.memory_space<vmem>>, %arg3: memref<1x128xbf16, #tpu.memory_space<vmem>>, %arg4: memref<128x128xbf16, #tpu.memory_space<vmem>>, %arg5: memref<1x128xbf16, #tpu.memory_space<vmem>>, %arg6: memref<128x128xbf16, #tpu.memory_space<vmem>>, %arg7: memref<1x128xf32, #tpu.memory_space<vmem>>, %arg8: memref<8x128xf32, #tpu.memory_space<vmem>>) attributes {dimension_semantics = [#tpu.dimension_semantics<parallel>], iteration_bounds = array<i64: 1>, scalar_prefetch = 0 : i64, scratch_operands = 0 : i64, tpu.core_type = #tpu.core_type<tc>, window_params = [{transform_indices = @transform_0, window_bounds = array<i64: 8, 32>}, {pipeline_mode = #tpu.pipeline_mode<synchronous>, transform_indices = @transform_1, window_bounds = array<i64: 32, 128>}, {pipeline_mode = #tpu.pipeline_mode<synchronous>, transform_indices = @transform_2, window_bounds = array<i64: 1, 128>}, {pipeline_mode = #tpu.pipeline_mode<synchronous>, transform_indices = @transform_3, window_bounds = array<i64: 128, 128>}, {pipeline_mode = #tpu.pipeline_mode<synchronous>, transform_indices = @transform_4, window_bounds = array<i64: 1, 128>}, {pipeline_mode = #tpu.pipeline_mode<synchronous>, transform_indices = @transform_5, window_bounds = array<i64: 128, 128>}, {pipeline_mode = #tpu.pipeline_mode<synchronous>, transform_indices = @transform_6, window_bounds = array<i64: 1, 128>}, {transform_indices = @transform_7, window_bounds = array<i64: 8, 128>}]} {
    %c0 = arith.constant 0 : index
    %c0_0 = arith.constant 0 : index
    %0 = vector.load %arg1[%c0, %c0_0] : memref<8x32xbf16, #tpu.memory_space<vmem>>, vector<8x32xbf16>
    %c0_1 = arith.constant 0 : index
    %c0_2 = arith.constant 0 : index
    %1 = vector.load %arg2[%c0_1, %c0_2] : memref<32x128xbf16, #tpu.memory_space<vmem>>, vector<32x128xbf16>
    %c0_3 = arith.constant 0 : index
    %c0_4 = arith.constant 0 : index
    %2 = vector.load %arg3[%c0_3, %c0_4] : memref<1x128xbf16, #tpu.memory_space<vmem>>, vector<1x128xbf16>
    %cst = arith.constant dense<0.000000e+00> : vector<8x128xf32>
    %3 = tpu.matmul %0, %1, %cst {dimension_numbers = #tpu.dot_dimension_numbers<[1], [0], [0], [1], [0, 0, 1, 1], [], []>} : vector<8x32xbf16>, vector<32x128xbf16>, vector<8x128xf32> -> vector<8x128xf32>
    %4 = arith.truncf %3 : vector<8x128xf32> to vector<8x128xbf16>
    %5 = vector.broadcast %2 : vector<1x128xbf16> to vector<8x128xbf16>
    %6 = arith.addf %4, %5 : vector<8x128xbf16>
    %7 = math.tanh %6 : vector<8x128xbf16>
    %c0_5 = arith.constant 0 : index
    %c0_6 = arith.constant 0 : index
    %8 = vector.load %arg4[%c0_5, %c0_6] : memref<128x128xbf16, #tpu.memory_space<vmem>>, vector<128x128xbf16>
    %c0_7 = arith.constant 0 : index
    %c0_8 = arith.constant 0 : index
    %9 = vector.load %arg5[%c0_7, %c0_8] : memref<1x128xbf16, #tpu.memory_space<vmem>>, vector<1x128xbf16>
    %cst_9 = arith.constant dense<0.000000e+00> : vector<8x128xf32>
    %10 = tpu.matmul %7, %8, %cst_9 {dimension_numbers = #tpu.dot_dimension_numbers<[1], [0], [0], [1], [0, 0, 1, 1], [], []>} : vector<8x128xbf16>, vector<128x128xbf16>, vector<8x128xf32> -> vector<8x128xf32>
    %11 = arith.truncf %10 : vector<8x128xf32> to vector<8x128xbf16>
    %12 = vector.broadcast %9 : vector<1x128xbf16> to vector<8x128xbf16>
    %13 = arith.addf %11, %12 : vector<8x128xbf16>
    %14 = math.tanh %13 : vector<8x128xbf16>
    %c0_10 = arith.constant 0 : index
    %c0_11 = arith.constant 0 : index
    %15 = vector.load %arg6[%c0_10, %c0_11] : memref<128x128xbf16, #tpu.memory_space<vmem>>, vector<128x128xbf16>
    %c0_12 = arith.constant 0 : index
    %c0_13 = arith.constant 0 : index
    %16 = vector.load %arg7[%c0_12, %c0_13] : memref<1x128xf32, #tpu.memory_space<vmem>>, vector<1x128xf32>
    %cst_14 = arith.constant dense<0.000000e+00> : vector<8x128xf32>
    %17 = tpu.matmul %14, %15, %cst_14 {dimension_numbers = #tpu.dot_dimension_numbers<[1], [0], [0], [1], [0, 0, 1, 1], [], []>} : vector<8x128xbf16>, vector<128x128xbf16>, vector<8x128xf32> -> vector<8x128xf32>
    %18 = vector.broadcast %16 : vector<1x128xf32> to vector<8x128xf32>
    %19 = arith.addf %17, %18 : vector<8x128xf32>
    %c0_15 = arith.constant 0 : index
    %c0_16 = arith.constant 0 : index
    %20 = vector.load %arg8[%c0_15, %c0_16] : memref<8x128xf32, #tpu.memory_space<vmem>>, vector<8x128xf32>
    tpu.vector_store %arg8[%c0_15, %c0_16], %19 {strides = array<i32>} : memref<8x128xf32, #tpu.memory_space<vmem>>, vector<8x128xf32>,
    return
  }
  func.func @transform_0(%arg0: i32) -> (i32, i32) {
    %c0_i32 = arith.constant 0 : i32
    %c0_i32_0 = arith.constant 0 : i32
    return %arg0, %c0_i32 : i32, i32
  }
  func.func @transform_1(%arg0: i32) -> (i32, i32) {
    %c0_i32 = arith.constant 0 : i32
    %c0_i32_0 = arith.constant 0 : i32
    %c0_i32_1 = arith.constant 0 : i32
    return %c0_i32, %c0_i32_0 : i32, i32
  }
  func.func @transform_2(%arg0: i32) -> (i32, i32) {
    %c0_i32 = arith.constant 0 : i32
    %c0_i32_0 = arith.constant 0 : i32
    %c0_i32_1 = arith.constant 0 : i32
    return %c0_i32, %c0_i32_0 : i32, i32
  }
  func.func @transform_3(%arg0: i32) -> (i32, i32) {
    %c0_i32 = arith.constant 0 : i32
    %c0_i32_0 = arith.constant 0 : i32
    %c0_i32_1 = arith.constant 0 : i32
    return %c0_i32, %c0_i32_0 : i32, i32
  }
  func.func @transform_4(%arg0: i32) -> (i32, i32) {
    %c0_i32 = arith.constant 0 : i32
    %c0_i32_0 = arith.constant 0 : i32
    %c0_i32_1 = arith.constant 0 : i32
    return %c0_i32, %c0_i32_0 : i32, i32
  }
  func.func @transform_5(%arg0: i32) -> (i32, i32) {
    %c0_i32 = arith.constant 0 : i32
    %c0_i32_0 = arith.constant 0 : i32
    %c0_i32_1 = arith.constant 0 : i32
    return %c0_i32, %c0_i32_0 : i32, i32
  }
  func.func @transform_6(%arg0: i32) -> (i32, i32) {
    %c0_i32 = arith.constant 0 : i32
    %c0_i32_0 = arith.constant 0 : i32
    %c0_i32_1 = arith.constant 0 : i32
    return %c0_i32, %c0_i32_0 : i32, i32
  }
  func.func @transform_7(%arg0: i32) -> (i32, i32) {
    %c0_i32 = arith.constant 0 : i32
    %c0_i32_0 = arith.constant 0 : i32
    return %arg0, %c0_i32 : i32, i32
  }
}

</mosaic_0001>

<llo_original>
// kernel: estimator_forward.1
$region0: #{estimator_forward.1}
  #allocation0 [shape = 'u32[]', space=smem, size = 0x4, offset = 0x4, fixed_abs, tag = 'smem constant byte address 0x4 - core index']
  #allocation1 [shape = 'u32[144,128]{1,0:T(1,128)}', space=vmem, size = 0x12000, scoped, tag = 'internal scratch']
  %s0 = inlined_call_operand.vmem [shape: bf16[8,32], index: 0, kind: input, shape index: {}]
  %s1 = inlined_call_operand.hbm [shape: bf16[32,128], index: 1, kind: input, shape index: {}]
  %s2 = inlined_call_operand.vmem [shape: bf16[1,128], index: 2, kind: input, shape index: {}]
  %s3 = inlined_call_operand.hbm [shape: bf16[128,128], index: 3, kind: input, shape index: {}]
  %s4 = inlined_call_operand.vmem [shape: bf16[1,128], index: 4, kind: input, shape index: {}]
  %s5 = inlined_call_operand.hbm [shape: bf16[128,128], index: 5, kind: input, shape index: {}]
  %s6 = inlined_call_operand.vmem [shape: f32[1,128], index: 6, kind: input, shape index: {}]
  %s7 = inlined_call_operand.hbm [shape: f32[8,128], index: 7, kind: output, shape index: {}]
  %s8 = sld [smem:[#allocation0]]
  $region50: #{estimator_forward.1} parent=0
    _
  %s10 = ssub.s32 1, %s8
  %s11 = scalar_select 0, %s10, %s8
  $region1: #{estimator_forward.1} parent=0
    #allocation2 [shape = 'u8[8192]{0}', space=vmem, size = 0x2000, scoped, tag = 'input window, operand 1, single buffered']
    #allocation3 [shape = 's32[1]{0}', space=sflag, size = 0x4, scoped, tag = 'scoped memory for estimator_forward.1']
    #allocation4 [shape = 's32[1]{0}', space=sflag, size = 0x4, scoped, tag = 'scoped memory for estimator_forward.1']
    #allocation5 [shape = 'u8[32768]{0}', space=vmem, size = 0x8000, scoped, tag = 'input window, operand 3, single buffered']
    #allocation6 [shape = 's32[1]{0}', space=sflag, size = 0x4, scoped, tag = 'scoped memory for estimator_forward.1']
    #allocation7 [shape = 'u8[32768]{0}', space=vmem, size = 0x8000, scoped, tag = 'input window, operand 5, single buffered']
    #allocation8 [shape = 'u8[4096]{0}', space=vmem, size = 0x1000, scoped, tag = 'output window, operand 0, single buffered']
    %12 = vsyncpa [#allocation3], 0
    %13 = vsyncpa [#allocation6], 0
    %14 = vsyncpa [#allocation4], 0
    // Predicated region
    $region2: #{estimator_forward.1} parent=1 // pred_check
      _
    $region3: #{estimator_forward.1} parent=1 // pred_check_branch
      %16 = sbr.rel (0) target = $region5
    $region4: #{estimator_forward.1} parent=1 // pred_region
      _
    $region5: #{estimator_forward.1} parent=1 // pred_fallthru
      _
    // Predicated region
    $region6: #{estimator_forward.1} parent=1 // pred_check
      _
    $region7: #{estimator_forward.1} parent=1 // pred_check_branch
      %18 = sbr.rel (0) target = $region9
    $region8: #{estimator_forward.1} parent=1 // pred_region
      %s20 = ssub.s32 256, 256
      %21 = vsyncadd [#allocation3], %s20
      %s22 = sshll.u32 [#allocation2], 4
      %s23 = int_to_ptr.vmem [resolvable:$true] %s22
      %28 = dma.hbm_to_vmem [thread:$0]  %s1, 256, %s23, [#allocation3], 64, 64, 4
    $region9: #{estimator_forward.1} parent=1 // pred_fallthru
      _
    // Predicated region
    $region10: #{estimator_forward.1} parent=1 // pred_check
      _
    $region11: #{estimator_forward.1} parent=1 // pred_check_branch
      %30 = sbr.rel (0) target = $region13
    $region12: #{estimator_forward.1} parent=1 // pred_region
      _
    $region13: #{estimator_forward.1} parent=1 // pred_fallthru
      _
    // Predicated region
    $region14: #{estimator_forward.1} parent=1 // pred_check
      _
    $region15: #{estimator_forward.1} parent=1 // pred_check_branch
      %32 = sbr.rel (0) target = $region17
    $region16: #{estimator_forward.1} parent=1 // pred_region
      %s34 = ssub.s32 1024, 1024
      %35 = vsyncadd [#allocation6], %s34
      %s36 = sshll.u32 [#allocation5], 4
      %s37 = int_to_ptr.vmem [resolvable:$true] %s36
      %42 = dma.hbm_to_vmem [thread:$0]  %s3, 1024, %s37, [#allocation6], 64, 64, 4
    $region17: #{estimator_forward.1} parent=1 // pred_fallthru
      _
    // Predicated region
    $region18: #{estimator_forward.1} parent=1 // pred_check
      _
    $region19: #{estimator_forward.1} parent=1 // pred_check_branch
      %44 = sbr.rel (0) target = $region21
    $region20: #{estimator_forward.1} parent=1 // pred_region
      _
    $region21: #{estimator_forward.1} parent=1 // pred_fallthru
      _
    // Predicated region
    $region22: #{estimator_forward.1} parent=1 // pred_check
      _
    $region23: #{estimator_forward.1} parent=1 // pred_check_branch
      %46 = sbr.rel (0) target = $region25
    $region24: #{estimator_forward.1} parent=1 // pred_region
      %s48 = ssub.s32 1024, 1024
      %49 = vsyncadd [#allocation6], %s48
      %s50 = sshll.u32 [#allocation7], 4
      %s51 = int_to_ptr.vmem [resolvable:$true] %s50
      %56 = dma.hbm_to_vmem [thread:$0]  %s5, 1024, %s51, [#allocation6], 64, 64, 4
    $region25: #{estimator_forward.1} parent=1 // pred_fallthru
      _
    // Predicated region
    $region26: #{estimator_forward.1} parent=1 // pred_check
      _
    $region27: #{estimator_forward.1} parent=1 // pred_check_branch
      %58 = sbr.rel (0) target = $region29
    $region28: #{estimator_forward.1} parent=1 // pred_region
      _
    $region29: #{estimator_forward.1} parent=1 // pred_fallthru
      _
    // Predicated region
    $region30: #{estimator_forward.1} parent=1 // pred_check
      _
    $region31: #{estimator_forward.1} parent=1 // pred_check_branch
      %60 = sbr.rel (0) target = $region33
    $region32: #{estimator_forward.1} parent=1 // pred_region
      %61 = dma.done [#allocation3], 256
    $region33: #{estimator_forward.1} parent=1 // pred_fallthru
      _
    // Predicated region
    $region34: #{estimator_forward.1} parent=1 // pred_check
      _
    $region35: #{estimator_forward.1} parent=1 // pred_check_branch
      %63 = sbr.rel (0) target = $region37
    $region36: #{estimator_forward.1} parent=1 // pred_region
      %64 = dma.done [#allocation6], 1024
    $region37: #{estimator_forward.1} parent=1 // pred_fallthru
      _
    // Predicated region
    $region38: #{estimator_forward.1} parent=1 // pred_check
      _
    $region39: #{estimator_forward.1} parent=1 // pred_check_branch
      %66 = sbr.rel (0) target = $region41
    $region40: #{estimator_forward.1} parent=1 // pred_region
      %67 = dma.done [#allocation6], 1024
    $region41: #{estimator_forward.1} parent=1 // pred_fallthru
      _
    %v69 = vld [vmem:[%s0] sm:$0xf]
    %v70 = vld [vmem:[#allocation2] sm:$0xf]
    %v71 = vld [vmem:[#allocation2 + $0x4] sm:$0xf]
    %v72 = vld [vmem:[#allocation2 + $0x8] sm:$0xf]
    %v73 = vld [vmem:[#allocation2 + $0xc] sm:$0xf]
    %v74 = vld [vmem:[%s2] sm:$0x1]
    %v79 = vunpack.c.l.b16 %v70
    %v80 = vunpack.c.l.b16 %v71
    %v81 = vunpack.c.l.b16 %v72
    %v82 = vunpack.c.l.b16 %v73
    %v83 = vpack.c.b16 %v80, %v79
    %v84 = vpack.c.b16 %v82, %v81
    %vm87 = vcmask 261120
    %v89 = vsel %vm87, %v69, 0
    %91 = vmatprep.subr.bf16.mxu0 0
    %92 = vmatpush1.bf16.msra.mxu0 %v83
    %93 = vmatprep.subr.bf16.mxu0 0
    %94 = vmatpush1.bf16.msra.mxu0 %v84
    %95 = vmatprep.subr.bf16.mxu0 0
    %96 = vmatpush1.bf16.msra.mxu0 0
    %97 = vmatprep.subr.bf16.mxu0 0
    %98 = vmatpush1.bf16.msra.mxu0 0
    %99 = vmatprep.subr.bf16.mxu0 0
    %100 = vmatpush1.bf16.msra.mxu0 0
    %101 = vmatprep.subr.bf16.mxu0 0
    %102 = vmatpush1.bf16.msra.mxu0 0
    %103 = vmatprep.subr.bf16.mxu0 0
    %104 = vmatpush1.bf16.msra.mxu0 0
    %105 = vmatprep.subr.bf16.mxu0 0
    %106 = vmatpush1.bf16.msra.mxu0 0
    %107 = vmatprep.subr.bf16.mxu0 0
    %108 = vmatpush1.bf16.msra.mxu0 0
    %109 = vmatprep.subr.bf16.mxu0 0
    %110 = vmatpush1.bf16.msra.mxu0 0
    %111 = vmatprep.subr.bf16.mxu0 0
    %112 = vmatpush1.bf16.msra.mxu0 0
    %113 = vmatprep.subr.bf16.mxu0 0
    %114 = vmatpush1.bf16.msra.mxu0 0
    %115 = vmatprep.subr.bf16.mxu0 0
    %116 = vmatpush1.bf16.msra.mxu0 0
    %117 = vmatprep.subr.bf16.mxu0 0
    %118 = vmatpush1.bf16.msra.mxu0 0
    %119 = vmatprep.subr.bf16.mxu0 0
    %120 = vmatpush1.bf16.msra.mxu0 0
    %121 = vmatprep.subr.bf16.mxu0 0
    %122 = vmatpush1.bf16.msra.mxu0 0
    %123 = vmatprep.mubr.bf16.mxu0 0
    %124 = vmatmul.mubr.bf16.gmra.mrb[0].mxu0 %v89
    %v125 = vpop.f32.mrb[0].mxu0
    %v126 = vadd.f32 0.0, %v125
    %v127 = vpop.f32.mrb[0].mxu0
    %v128 = vpop.f32.mrb[0].mxu0
    %v129 = vpop.f32.mrb[0].mxu0
    %130 = vdwg.mxu0
    %v131 = vpack.c.bf16 %v126, %v126
    %v133 = vpack.i.b16 %v74, %v74
    %v135 = vlaneseq
    %v136 = vshrl.u32 %v135, 7
    %v137 = vsub.s32 0, %v136
    %v138 = vrot.slane %v133, %v137
    %v139 = vadd.bf16 %v131, %v138
    %v140 = vtanh.bf16.pop %v139
    %v141 = vld [vmem:[#allocation5] sm:$0xf]
    %v142 = vld [vmem:[#allocation5 + $0x4] sm:$0xf]
    %v143 = vld [vmem:[#allocation5 + $0x8] sm:$0xf]
    %v144 = vld [vmem:[#allocation5 + $0xc] sm:$0xf]
    %v145 = vld [vmem:[#allocation5 + $0x10] sm:$0xf]
    %v146 = vld [vmem:[#allocation5 + $0x14] sm:$0xf]
    %v147 = vld [vmem:[#allocation5 + $0x18] sm:$0xf]
    %v148 = vld [vmem:[#allocation5 + $0x1c] sm:$0xf]
    %v149 = vld [vmem:[#allocation5 + $0x20] sm:$0xf]
    %v150 = vld [vmem:[#allocation5 + $0x24] sm:$0xf]
    %v151 = vld [vmem:[#allocation5 + $0x28] sm:$0xf]
    %v152 = vld [vmem:[#allocation5 + $0x2c] sm:$0xf]
    %v153 = vld [vmem:[#allocation5 + $0x30] sm:$0xf]
    %v154 = vld [vmem:[#allocation5 + $0x34] sm:$0xf]
    %v155 = vld [vmem:[#allocation5 + $0x38] sm:$0xf]
    %v156 = vld [vmem:[#allocation5 + $0x3c] sm:$0xf]
    %v157 = vld [vmem:[%s4] sm:$0x1]
    %v174 = vunpack.c.l.b16 %v141
    %v175 = vunpack.c.l.b16 %v142
    %v176 = vunpack.c.l.b16 %v143
    %v177 = vunpack.c.l.b16 %v144
    %v178 = vunpack.c.l.b16 %v145
    %v179 = vunpack.c.l.b16 %v146
    %v180 = vunpack.c.l.b16 %v147
    %v181 = vunpack.c.l.b16 %v148
    %v182 = vunpack.c.l.b16 %v149
    %v183 = vunpack.c.l.b16 %v150
    %v184 = vunpack.c.l.b16 %v151
    %v185 = vunpack.c.l.b16 %v152
    %v186 = vunpack.c.l.b16 %v153
    %v187 = vunpack.c.l.b16 %v154
    %v188 = vunpack.c.l.b16 %v155
    %v189 = vunpack.c.l.b16 %v156
    %v190 = vpack.c.b16 %v175, %v174
    %v191 = vpack.c.b16 %v177, %v176
    %v192 = vpack.c.b16 %v179, %v178
    %v193 = vpack.c.b16 %v181, %v180
    %v194 = vpack.c.b16 %v183, %v182
    %v195 = vpack.c.b16 %v185, %v184
    %v196 = vpack.c.b16 %v187, %v186
    %v197 = vpack.c.b16 %v189, %v188
    %206 = vmatprep.subr.bf16.mxu0 0
    %207 = vmatpush1.bf16.msra.mxu0 %v190
    %208 = vmatprep.subr.bf16.mxu0 0
    %209 = vmatpush1.bf16.msra.mxu0 %v191
    %210 = vmatprep.subr.bf16.mxu0 0
    %211 = vmatpush1.bf16.msra.mxu0 %v192
    %212 = vmatprep.subr.bf16.mxu0 0
    %213 = vmatpush1.bf16.msra.mxu0 %v193
    %214 = vmatprep.subr.bf16.mxu0 0
    %215 = vmatpush1.bf16.msra.mxu0 %v194
    %216 = vmatprep.subr.bf16.mxu0 0
    %217 = vmatpush1.bf16.msra.mxu0 %v195
    %218 = vmatprep.subr.bf16.mxu0 0
    %219 = vmatpush1.bf16.msra.mxu0 %v196
    %220 = vmatprep.subr.bf16.mxu0 0
    %221 = vmatpush1.bf16.msra.mxu0 %v197
    %222 = vmatprep.subr.bf16.mxu0 0
    %223 = vmatpush1.bf16.msra.mxu0 0
    %224 = vmatprep.subr.bf16.mxu0 0
    %225 = vmatpush1.bf16.msra.mxu0 0
    %226 = vmatprep.subr.bf16.mxu0 0
    %227 = vmatpush1.bf16.msra.mxu0 0
    %228 = vmatprep.subr.bf16.mxu0 0
    %229 = vmatpush1.bf16.msra.mxu0 0
    %230 = vmatprep.subr.bf16.mxu0 0
    %231 = vmatpush1.bf16.msra.mxu0 0
    %232 = vmatprep.subr.bf16.mxu0 0
    %233 = vmatpush1.bf16.msra.mxu0 0
    %234 = vmatprep.subr.bf16.mxu0 0
    %235 = vmatpush1.bf16.msra.mxu0 0
    %236 = vmatprep.subr.bf16.mxu0 0
    %237 = vmatpush1.bf16.msra.mxu0 0
    %238 = vmatprep.mubr.bf16.mxu0 0
    %239 = vmatmul.mubr.bf16.gmra.mrb[0].mxu0 %v140
    %v240 = vpop.f32.mrb[0].mxu0
    %v241 = vadd.f32 0.0, %v240
    %v242 = vpop.f32.mrb[0].mxu0
    %v243 = vpop.f32.mrb[0].mxu0
    %v244 = vpop.f32.mrb[0].mxu0
    %245 = vdwg.mxu0
    %v246 = vpack.c.bf16 %v241, %v241
    %v248 = vpack.i.b16 %v157, %v157
    %v250 = vlaneseq
    %v251 = vshrl.u32 %v250, 7
    %v252 = vsub.s32 0, %v251
    %v253 = vrot.slane %v248, %v252
    %v254 = vadd.bf16 %v246, %v253
    %v255 = vtanh.bf16.pop %v254
    %v256 = vld [vmem:[#allocation7] sm:$0xf]
    %v257 = vld [vmem:[#allocation7 + $0x4] sm:$0xf]
    %v258 = vld [vmem:[#allocation7 + $0x8] sm:$0xf]
    %v259 = vld [vmem:[#allocation7 + $0xc] sm:$0xf]
    %v260 = vld [vmem:[#allocation7 + $0x10] sm:$0xf]
    %v261 = vld [vmem:[#allocation7 + $0x14] sm:$0xf]
    %v262 = vld [vmem:[#allocation7 + $0x18] sm:$0xf]
    %v263 = vld [vmem:[#allocation7 + $0x1c] sm:$0xf]
    %v264 = vld [vmem:[#allocation7 + $0x20] sm:$0xf]
    %v265 = vld [vmem:[#allocation7 + $0x24] sm:$0xf]
    %v266 = vld [vmem:[#allocation7 + $0x28] sm:$0xf]
    %v267 = vld [vmem:[#allocation7 + $0x2c] sm:$0xf]
    %v268 = vld [vmem:[#allocation7 + $0x30] sm:$0xf]
    %v269 = vld [vmem:[#allocation7 + $0x34] sm:$0xf]
    %v270 = vld [vmem:[#allocation7 + $0x38] sm:$0xf]
    %v271 = vld [vmem:[#allocation7 + $0x3c] sm:$0xf]
    %v272 = vld [vmem:[%s6] sm:$0x1]
    %v274 = vlaneseq
    %v275 = vshrl.u32 %v274, 7
    %v276 = vsub.s32 0, %v275
    %v277 = vrot.slane %v272, %v276
    %v295 = vunpack.c.l.b16 %v256
    %v296 = vunpack.c.l.b16 %v257
    %v297 = vunpack.c.l.b16 %v258
    %v298 = vunpack.c.l.b16 %v259
    %v299 = vunpack.c.l.b16 %v260
    %v300 = vunpack.c.l.b16 %v261
    %v301 = vunpack.c.l.b16 %v262
    %v302 = vunpack.c.l.b16 %v263
    %v303 = vunpack.c.l.b16 %v264
    %v304 = vunpack.c.l.b16 %v265
    %v305 = vunpack.c.l.b16 %v266
    %v306 = vunpack.c.l.b16 %v267
    %v307 = vunpack.c.l.b16 %v268
    %v308 = vunpack.c.l.b16 %v269
    %v309 = vunpack.c.l.b16 %v270
    %v310 = vunpack.c.l.b16 %v271
    %v311 = vpack.c.b16 %v296, %v295
    %v312 = vpack.c.b16 %v298, %v297
    %v313 = vpack.c.b16 %v300, %v299
    %v314 = vpack.c.b16 %v302, %v301
    %v315 = vpack.c.b16 %v304, %v303
    %v316 = vpack.c.b16 %v306, %v305
    %v317 = vpack.c.b16 %v308, %v307
    %v318 = vpack.c.b16 %v310, %v309
    %327 = vmatprep.subr.bf16.mxu0 0
    %328 = vmatpush1.bf16.msra.mxu0 %v311
    %329 = vmatprep.subr.bf16.mxu0 0
    %330 = vmatpush1.bf16.msra.mxu0 %v312
    %331 = vmatprep.subr.bf16.mxu0 0
    %332 = vmatpush1.bf16.msra.mxu0 %v313
    %333 = vmatprep.subr.bf16.mxu0 0
    %334 = vmatpush1.bf16.msra.mxu0 %v314
    %335 = vmatprep.subr.bf16.mxu0 0
    %336 = vmatpush1.bf16.msra.mxu0 %v315
    %337 = vmatprep.subr.bf16.mxu0 0
    %338 = vmatpush1.bf16.msra.mxu0 %v316
    %339 = vmatprep.subr.bf16.mxu0 0
    %340 = vmatpush1.bf16.msra.mxu0 %v317
    %341 = vmatprep.subr.bf16.mxu0 0
    %342 = vmatpush1.bf16.msra.mxu0 %v318
    %343 = vmatprep.subr.bf16.mxu0 0
    %344 = vmatpush1.bf16.msra.mxu0 0
    %345 = vmatprep.subr.bf16.mxu0 0
    %346 = vmatpush1.bf16.msra.mxu0 0
    %347 = vmatprep.subr.bf16.mxu0 0
    %348 = vmatpush1.bf16.msra.mxu0 0
    %349 = vmatprep.subr.bf16.mxu0 0
    %350 = vmatpush1.bf16.msra.mxu0 0
    %351 = vmatprep.subr.bf16.mxu0 0
    %352 = vmatpush1.bf16.msra.mxu0 0
    %353 = vmatprep.subr.bf16.mxu0 0
    %354 = vmatpush1.bf16.msra.mxu0 0
    %355 = vmatprep.subr.bf16.mxu0 0
    %356 = vmatpush1.bf16.msra.mxu0 0
    %357 = vmatprep.subr.bf16.mxu0 0
    %358 = vmatpush1.bf16.msra.mxu0 0
    %359 = vmatprep.mubr.bf16.mxu0 0
    %360 = vmatmul.mubr.bf16.gmra.mrb[0].mxu0 %v255
    %v361 = vpop.f32.mrb[0].mxu0
    %v362 = vadd.f32 %v277, %v361
    %v363 = vpop.f32.mrb[0].mxu0
    %v364 = vpop.f32.mrb[0].mxu0
    %v365 = vpop.f32.mrb[0].mxu0
    %366 = vdwg.mxu0
    %367 = vst [vmem:[#allocation8] sm:$0xff] %v362
    // Predicated region
    $region42: #{estimator_forward.1} parent=1 // pred_check
      _
    $region43: #{estimator_forward.1} parent=1 // pred_check_branch
      %369 = sbr.rel (0) target = $region45
    $region44: #{estimator_forward.1} parent=1 // pred_region
      %s371 = ssub.s32 128, 128
      %372 = vsyncadd [#allocation4], %s371
      %s374 = sshll.u32 [#allocation8], 4
      %s375 = int_to_ptr.vmem [resolvable:$true] %s374
      %377 = dma.vmem_to_hbm [thread:$0]  %s375, 128, %s7, [#allocation4]
    $region45: #{estimator_forward.1} parent=1 // pred_fallthru
      _
    // Predicated region
    $region46: #{estimator_forward.1} parent=1 // pred_check
      _
    $region47: #{estimator_forward.1} parent=1 // pred_check_branch
      %379 = sbr.rel (0) target = $region49
    $region48: #{estimator_forward.1} parent=1 // pred_region
      %380 = dma.done [#allocation4], 128
    $region49: #{estimator_forward.1} parent=1 // pred_fallthru
      _
    %381 = vsyncpa [#allocation3], 1
    %382 = vsyncpa [#allocation6], 1
    %383 = vsyncpa [#allocation4], 1

</llo_original>
